<compile_context>
chip_gen: v5e
topology: v5e:2x2
jax: 0.10.0
libtpu: 0.0.40
codegen_flags: <defaults>
</compile_context>

<pallas_src>
import jax
import jax.numpy as jnp
from jax.experimental import pallas as pl
from jax.experimental.pallas import tpu as pltpu

dim_state = 3
dim_control = 3


# ----------------------------------------------------------------------------
# Single-step forward: dx = x @ A_w.T + a_b + u @ B_w.T + b_b
# ----------------------------------------------------------------------------
def dynamics_step_kernel(x_ref, u_ref, aw_ref, bw_ref, b_ref, o_ref):
    # Two MXU dots accumulated in f32 (no wrapper concat needed); on v7x the
    # MRB accumulates the second dot in place, on v5e/v6e it is one extra pop
    # + VPU add — still cheaper than an extra XLA dispatch per call.
    acc = jnp.dot(x_ref[...], aw_ref[...], preferred_element_type=jnp.float32)
    acc = acc + jnp.dot(u_ref[...], bw_ref[...],
                        preferred_element_type=jnp.float32)
    o_ref[...] = (acc + b_ref[...]).astype(o_ref.dtype)


def _full_spec(shape):
    return pl.BlockSpec(shape, lambda: tuple(0 for _ in shape))


def dynamics_step(x, u, a_wt, b_wt, bias):
    """x: (B, ds), u: (B, dc); a_wt: (ds, ds), b_wt: (dc, ds) pre-transposed
    to (in, out); bias: (1, ds) = a_b + b_b.  Returns dx: (B, ds)."""
    batch, ds = x.shape[0], a_wt.shape[1]
    dc = b_wt.shape[0]
    return pl.pallas_call(
        dynamics_step_kernel,
        out_shape=jax.ShapeDtypeStruct((batch, ds), x.dtype),
        grid=(),
        in_specs=[
            _full_spec((batch, ds)),
            _full_spec((batch, dc)),
            _full_spec((ds, ds)),
            _full_spec((dc, ds)),
            _full_spec((1, ds)),
        ],
        out_specs=_full_spec((batch, ds)),
    )(x, u, a_wt, b_wt, bias)


_dynamics_step_jit = jax.jit(dynamics_step)


class DynamicsPallas:
    """Mirrors the torch module: stores params, forward(x, u) -> dx.

    All parameter prep (weight transpose to (in, out), bias fusion) happens
    exactly once here, so the per-call path is a single pallas_call with no
    wrapper XLA ops.
    """

    def __init__(self, a_w, a_b, b_w, b_b):
        self.a_wt = jnp.asarray(a_w).T                 # (ds, ds), (in, out)
        self.b_wt = jnp.asarray(b_w).T                 # (dc, ds), (in, out)
        ds = self.a_wt.shape[1]
        self.bias = (jnp.asarray(a_b) + jnp.asarray(b_b)).reshape(1, ds)

    def __call__(self, x, u):
        return _dynamics_step_jit(x, u, self.a_wt, self.b_wt, self.bias)


# ----------------------------------------------------------------------------
# Fused rollout: T dynamics steps in ONE pallas_call (x_{t+1} = x_t + dx_t).
# Weights resident in VMEM, state carried in VMEM scratch, `chunk` steps
# unrolled per grid iteration.
# ----------------------------------------------------------------------------
def dynamics_rollout_kernel(x0_ref, u_ref, aw_ref, bw_ref, b_ref,
                            xs_ref, state_ref):
    @pl.when(pl.program_id(0) == 0)
    def _():
        state_ref[...] = x0_ref[...].astype(jnp.float32)

    x = state_ref[...]
    aw = aw_ref[...]
    bw = bw_ref[...]
    b = b_ref[...]
    # Static unroll over the chunk: amortizes per-grid-step overhead.
    for i in range(u_ref.shape[0]):
        dx = (jnp.dot(x, aw, preferred_element_type=jnp.float32)
              + jnp.dot(u_ref[i], bw, preferred_element_type=jnp.float32)
              + b)
        x = x + dx
        xs_ref[i] = x.astype(xs_ref.dtype)
    state_ref[...] = x


def dynamics_rollout(x0, us, a_wt, b_wt, bias, *, chunk=8):
    """x0: (B, ds), us: (T, B, dc) -> trajectory of states (T, B, ds)."""
    T, batch, dc = us.shape
    ds = a_wt.shape[1]
    assert T % chunk == 0, "T must be a multiple of chunk"
    return pl.pallas_call(
        dynamics_rollout_kernel,
        out_shape=jax.ShapeDtypeStruct((T, batch, ds), x0.dtype),
        grid=(T // chunk,),
        in_specs=[
            pl.BlockSpec((batch, ds), lambda t: (0, 0)),       # x0 (resident)
            pl.BlockSpec((chunk, batch, dc), lambda t: (t, 0, 0)),  # u stream
            pl.BlockSpec((ds, ds), lambda t: (0, 0)),          # A_w.T resident
            pl.BlockSpec((dc, ds), lambda t: (0, 0)),          # B_w.T resident
            pl.BlockSpec((1, ds), lambda t: (0, 0)),           # bias resident
        ],
        out_specs=pl.BlockSpec((chunk, batch, ds), lambda t: (t, 0, 0)),
        scratch_shapes=[pltpu.VMEM((batch, ds), jnp.float32)],  # state carry
        compiler_params=pltpu.CompilerParams(
            dimension_semantics=("arbitrary",)),  # state carry -> sequential
    )(x0, us, a_wt, b_wt, bias)


# ----------------------------------------------------------------------------
# Pure-JAX references.
# ----------------------------------------------------------------------------
def reference_forward(x, u, a_w, a_b, b_w, b_b):
    return x @ a_w.T + a_b + u @ b_w.T + b_b


def reference_rollout(x0, us, a_w, a_b, b_w, b_b):
    def step(x, u):
        x_new = x + reference_forward(x, u, a_w, a_b, b_w, b_b)
        return x_new, x_new
    _, xs = jax.lax.scan(step, x0, us)
    return xs


if __name__ == "__main__":
    key = jax.random.PRNGKey(0)
    k_x, k_u, k_aw, k_ab, k_bw, k_bb, k_us = jax.random.split(key, 7)

    batch = 8
    T = 16  # rollout horizon (demo)

    # Torch-default-like init: uniform(-1/sqrt(fan_in), 1/sqrt(fan_in)).
    bound_a = 1.0 / jnp.sqrt(jnp.float32(dim_state))
    bound_b = 1.0 / jnp.sqrt(jnp.float32(dim_control))
    a_w = jax.random.uniform(k_aw, (dim_state, dim_state), jnp.float32,
                             -bound_a, bound_a)
    a_b = jax.random.uniform(k_ab, (dim_state,), jnp.float32, -bound_a, bound_a)
    b_w = jax.random.uniform(k_bw, (dim_state, dim_control), jnp.float32,
                             -bound_b, bound_b)
    b_b = jax.random.uniform(k_bb, (dim_state,), jnp.float32, -bound_b, bound_b)

    x = jax.random.normal(k_x, (batch, dim_state), jnp.float32)
    u = jax.random.normal(k_u, (batch, dim_control), jnp.float32)

    # --- single-step forward (exact module semantics) ---
    dyn = DynamicsPallas(a_w, a_b, b_w, b_b)
    out = jax.block_until_ready(dyn(x, u))
    ref = reference_forward(x, u, a_w, a_b, b_w, b_b)
    assert out.shape == (batch, dim_state)
    assert jnp.allclose(out, ref, atol=1e-5, rtol=1e-5)

    # --- fused rollout (T steps, one pallas_call) ---
    us = jax.random.normal(k_us, (T, batch, dim_control), jnp.float32)
    traj = jax.block_until_ready(
        dynamics_rollout(x, us, dyn.a_wt, dyn.b_wt, dyn.bias, chunk=8))
    traj_ref = reference_rollout(x, us, a_w, a_b, b_w, b_b)
    assert traj.shape == (T, batch, dim_state)
    assert jnp.allclose(traj, traj_ref, atol=1e-3, rtol=1e-3)

    print("KERNEL_OK")
</pallas_src>

<mosaic_0001>
module attributes {stable_mosaic.version = 11 : i64} {
  func.func @dynamics_step_kernel(%arg0: memref<8x3xf32, #tpu.memory_space<vmem>>, %arg1: memref<8x3xf32, #tpu.memory_space<vmem>>, %arg2: memref<3x3xf32, #tpu.memory_space<vmem>>, %arg3: memref<3x3xf32, #tpu.memory_space<vmem>>, %arg4: memref<1x3xf32, #tpu.memory_space<vmem>>, %arg5: memref<8x3xf32, #tpu.memory_space<vmem>>) attributes {dimension_semantics = [], scalar_prefetch = 0 : i64, scratch_operands = 0 : i64, tpu.core_type = #tpu.core_type<tc>} {
    %c0 = arith.constant 0 : index
    %c0_0 = arith.constant 0 : index
    %0 = vector.load %arg0[%c0, %c0_0] : memref<8x3xf32, #tpu.memory_space<vmem>>, vector<8x3xf32>
    %c0_1 = arith.constant 0 : index
    %c0_2 = arith.constant 0 : index
    %1 = vector.load %arg2[%c0_1, %c0_2] : memref<3x3xf32, #tpu.memory_space<vmem>>, vector<3x3xf32>
    %cst = arith.constant dense<0.000000e+00> : vector<8x3xf32>
    %2 = tpu.matmul %0, %1, %cst {dimension_numbers = #tpu.dot_dimension_numbers<[1], [0], [0], [1], [0, 0, 1, 1], [], []>} : vector<8x3xf32>, vector<3x3xf32>, vector<8x3xf32> -> vector<8x3xf32>
    %c0_3 = arith.constant 0 : index
    %c0_4 = arith.constant 0 : index
    %3 = vector.load %arg1[%c0_3, %c0_4] : memref<8x3xf32, #tpu.memory_space<vmem>>, vector<8x3xf32>
    %c0_5 = arith.constant 0 : index
    %c0_6 = arith.constant 0 : index
    %4 = vector.load %arg3[%c0_5, %c0_6] : memref<3x3xf32, #tpu.memory_space<vmem>>, vector<3x3xf32>
    %cst_7 = arith.constant dense<0.000000e+00> : vector<8x3xf32>
    %5 = tpu.matmul %3, %4, %cst_7 {dimension_numbers = #tpu.dot_dimension_numbers<[1], [0], [0], [1], [0, 0, 1, 1], [], []>} : vector<8x3xf32>, vector<3x3xf32>, vector<8x3xf32> -> vector<8x3xf32>
    %6 = arith.addf %2, %5 : vector<8x3xf32>
    %c0_8 = arith.constant 0 : index
    %c0_9 = arith.constant 0 : index
    %7 = vector.load %arg4[%c0_8, %c0_9] : memref<1x3xf32, #tpu.memory_space<vmem>>, vector<1x3xf32>
    %8 = vector.broadcast %7 : vector<1x3xf32> to vector<8x3xf32>
    %9 = arith.addf %6, %8 : vector<8x3xf32>
    %c0_10 = arith.constant 0 : index
    %c0_11 = arith.constant 0 : index
    %10 = vector.load %arg5[%c0_10, %c0_11] : memref<8x3xf32, #tpu.memory_space<vmem>>, vector<8x3xf32>
    tpu.vector_store %arg5[%c0_10, %c0_11], %9 {strides = array<i32>} : memref<8x3xf32, #tpu.memory_space<vmem>>, vector<8x3xf32>,
    return
  }
}

</mosaic_0001>

<llo_original>
// kernel: dynamics_step.1
$region0: #{dynamics_step.1}
  #allocation0 [shape = 'u32[]', space=smem, size = 0x4, offset = 0x4, fixed_abs, tag = 'smem constant byte address 0x4 - core index']
  #allocation1 [shape = 'u32[72,128]{1,0:T(1,128)}', space=vmem, size = 0x9000, scoped, tag = 'internal scratch']
  %s0 = inlined_call_operand.vmem [shape: f32[8,3], index: 0, kind: input, shape index: {}]
  %s1 = inlined_call_operand.vmem [shape: f32[8,3], index: 1, kind: input, shape index: {}]
  %s2 = inlined_call_operand.vmem [shape: f32[3,3], index: 2, kind: input, shape index: {}]
  %s3 = inlined_call_operand.vmem [shape: f32[3,3], index: 3, kind: input, shape index: {}]
  %s4 = inlined_call_operand.vmem [shape: f32[1,3], index: 4, kind: input, shape index: {}]
  %s5 = inlined_call_operand.vmem [shape: f32[8,3], index: 5, kind: output, shape index: {}]
  %s6 = sld [smem:[#allocation0]]
  $region30: #{dynamics_step.1} parent=0
    _
  %s8 = ssub.s32 1, %s6
  %s9 = scalar_select 0, %s8, %s6
  // Predicated region
  $region2: #{dynamics_step.1} parent=0 // pred_check
    _
  $region3: #{dynamics_step.1} parent=0 // pred_check_branch
    %11 = sbr.rel (0) target = $region5
  $region4: #{dynamics_step.1} parent=0 // pred_region
    _
  $region5: #{dynamics_step.1} parent=0 // pred_fallthru
    _
  // Predicated region
  $region6: #{dynamics_step.1} parent=0 // pred_check
    _
  $region7: #{dynamics_step.1} parent=0 // pred_check_branch
    %13 = sbr.rel (0) target = $region9
  $region8: #{dynamics_step.1} parent=0 // pred_region
    _
  $region9: #{dynamics_step.1} parent=0 // pred_fallthru
    _
  // Predicated region
  $region10: #{dynamics_step.1} parent=0 // pred_check
    _
  $region11: #{dynamics_step.1} parent=0 // pred_check_branch
    %15 = sbr.rel (0) target = $region13
  $region12: #{dynamics_step.1} parent=0 // pred_region
    _
  $region13: #{dynamics_step.1} parent=0 // pred_fallthru
    _
  // Predicated region
  $region14: #{dynamics_step.1} parent=0 // pred_check
    _
  $region15: #{dynamics_step.1} parent=0 // pred_check_branch
    %17 = sbr.rel (0) target = $region17
  $region16: #{dynamics_step.1} parent=0 // pred_region
    _
  $region17: #{dynamics_step.1} parent=0 // pred_fallthru
    _
  // Predicated region
  $region18: #{dynamics_step.1} parent=0 // pred_check
    _
  $region19: #{dynamics_step.1} parent=0 // pred_check_branch
    %19 = sbr.rel (0) target = $region21
  $region20: #{dynamics_step.1} parent=0 // pred_region
    _
  $region21: #{dynamics_step.1} parent=0 // pred_fallthru
    _
  %v20 = vld [vmem:[%s0] sm:$0xff]
  %v21 = vld [vmem:[%s2] sm:$0x7]
  %v22 = vld [vmem:[%s1] sm:$0xff]
  %v23 = vld [vmem:[%s3] sm:$0x7]
  %vm24 = vcmask 23552
  %v26 = vsel %vm24, %v22, 0
  %vm28 = vcmask 1042432
  %v30 = vsel %vm28, %v23, 0
  %32 = vmatpush.msra.mxu0 0.0
  %33 = vmatpush.msra.mxu0 0.0
  %34 = vmatpush.msra.mxu0 0.0
  %35 = vmatpush.msra.mxu0 0.0
  %36 = vmatpush.msra.mxu0 0.0
  %37 = vmatpush.msra.mxu0 0.0
  %38 = vmatpush.msra.mxu0 0.0
  %39 = vmatpush.msra.mxu0 0.0
  %40 = vmatpush.msra.mxu0 0.0
  %41 = vmatpush.msra.mxu0 0.0
  %42 = vmatpush.msra.mxu0 0.0
  %43 = vmatpush.msra.mxu0 0.0
  %44 = vmatpush.msra.mxu0 0.0
  %45 = vmatpush.msra.mxu0 0.0
  %46 = vmatpush.msra.mxu0 0.0
  %47 = vmatpush.msra.mxu0 %v30
  %48 = vmatmul.f32.gmra.mxu0 %v26
  %v49 = vpop.f32.mrf.mxu0
  %v50 = vadd.f32 0.0, %v49
  %51 = vdwg.mxu0
  %v53 = vsel %vm24, %v20, 0
  %v56 = vsel %vm28, %v21, 0
  %58 = vmatpush.msra.mxu0 0.0
  %59 = vmatpush.msra.mxu0 0.0
  %60 = vmatpush.msra.mxu0 0.0
  %61 = vmatpush.msra.mxu0 0.0
  %62 = vmatpush.msra.mxu0 0.0
  %63 = vmatpush.msra.mxu0 0.0
  %64 = vmatpush.msra.mxu0 0.0
  %65 = vmatpush.msra.mxu0 0.0
  %66 = vmatpush.msra.mxu0 0.0
  %67 = vmatpush.msra.mxu0 0.0
  %68 = vmatpush.msra.mxu0 0.0
  %69 = vmatpush.msra.mxu0 0.0
  %70 = vmatpush.msra.mxu0 0.0
  %71 = vmatpush.msra.mxu0 0.0
  %72 = vmatpush.msra.mxu0 0.0
  %73 = vmatpush.msra.mxu0 %v56
  %74 = vmatmul.f32.gmra.mxu0 %v53
  %v75 = vpop.f32.mrf.mxu0
  %v76 = vadd.f32 %v50, %v75
  %77 = vdwg.mxu0
  %v78 = vld [vmem:[%s4] sm:$0x1]
  %v80 = vperm.slane %v78, 0
  %v82 = vadd.f32 %v76, %v80
  %83 = vst.msk [vmem:[%s5] sm:$0xff] %vm24, %v82
  // Predicated region
  $region22: #{dynamics_step.1} parent=0 // pred_check
    _
  $region23: #{dynamics_step.1} parent=0 // pred_check_branch
    %85 = sbr.rel (0) target = $region25
  $region24: #{dynamics_step.1} parent=0 // pred_region
    _
  $region25: #{dynamics_step.1} parent=0 // pred_fallthru
    _
  // Predicated region
  $region26: #{dynamics_step.1} parent=0 // pred_check
    _
  $region27: #{dynamics_step.1} parent=0 // pred_check_branch
    %87 = sbr.rel (0) target = $region29
  $region28: #{dynamics_step.1} parent=0 // pred_region
    _
  $region29: #{dynamics_step.1} parent=0 // pred_fallthru
    _

</llo_original>
